<compile_context>
chip_gen: v6e
topology: v6e:2x2x1
jax: 0.10.0
libtpu: 0.0.40
codegen_flags: <defaults>
</compile_context>

<pallas_src>
import jax
import jax.numpy as jnp
from jax.experimental import pallas as pl
from jax.experimental.pallas import tpu as pltpu


_MAX_TB = 256    # row-tile cap (sublane axis)
_MAX_TN = 1024   # column-tile cap (lane axis, reduction)


def _pick_tile(dim, unit, max_tile):
    """Largest legal tile for one axis.

    The (8,128) layout rule requires each of the last two block dims to be a
    multiple of `unit` OR the full array extent, and the grid math here wants
    the tile to divide the extent exactly.  Full extent is always legal.
    """
    if dim <= max_tile:
        return dim
    if dim % unit != 0:
        return dim                      # cannot tile legally; take the whole axis
    best = unit
    t = unit
    while t <= max_tile:
        if dim % t == 0:
            best = t
        t += unit
    return best


def _loss_kernel(y_ref, pred_ref, nan_ref, out_ref, sse_acc, cnt_acc):
    k = pl.program_id(1)
    nk = pl.num_programs(1)

    @pl.when(k == 0)
    def _init():
        sse_acc[...] = jnp.zeros_like(sse_acc)
        cnt_acc[...] = jnp.zeros_like(cnt_acc)

    # Squared error for this (row-tile, column-tile); upcast on load
    # (copy-free no-op when inputs are already f32).
    y = y_ref[...].astype(jnp.float32)
    p = pred_ref[...].astype(jnp.float32)
    d = y - p
    sse_acc[...] += jnp.sum(d * d, axis=1, keepdims=True)        # [tb, 1]

    # Non-NaN count: one VPU compare + convert (x == x is False only for NaN).
    x = nan_ref[...]
    cnt_acc[...] += jnp.sum((x == x).astype(jnp.float32), axis=1, keepdims=True)

    @pl.when(k == nk - 1)
    def _finalize():
        # Per-row mean (exact reciprocal to preserve tolerance), then the
        # partial batch sum for this row tile.
        means = sse_acc[...] * pl.reciprocal(cnt_acc[...], approx=False)
        out_ref[...] = jnp.sum(means, axis=0, keepdims=True)     # [1, 1]


def custom_loss_parameters(Y_l, pred_l, nan_array):
    """Pallas equivalent of custom_Loss_Parameters.forward (precision=float32)."""
    B, N = Y_l.shape
    assert pred_l.shape == (B, N)
    assert nan_array.shape == (B, N)

    tb = _pick_tile(B, 8, _MAX_TB)
    tn = _pick_tile(N, 128, _MAX_TN)
    nb, nk = B // tb, N // tn

    bytes_accessed = (Y_l.size * Y_l.dtype.itemsize
                      + pred_l.size * pred_l.dtype.itemsize
                      + nan_array.size * nan_array.dtype.itemsize
                      + nb * 4)

    partial = pl.pallas_call(
        _loss_kernel,
        out_shape=jax.ShapeDtypeStruct((nb, 1), jnp.float32),
        grid_spec=pltpu.PrefetchScalarGridSpec(
            num_scalar_prefetch=0,
            grid=(nb, nk),
            in_specs=[
                pl.BlockSpec((tb, tn), lambda b, k: (b, k)),
                pl.BlockSpec((tb, tn), lambda b, k: (b, k)),
                pl.BlockSpec((tb, tn), lambda b, k: (b, k)),
            ],
            # one distinct (1,1) output block per row tile -> safe to run the
            # B axis in parallel across TensorCores
            out_specs=pl.BlockSpec((1, 1), lambda b, k: (b, 0)),
            scratch_shapes=[
                pltpu.VMEM((tb, 1), jnp.float32),   # per-row sum of squared error
                pltpu.VMEM((tb, 1), jnp.float32),   # per-row non-NaN count
            ],
        ),
        compiler_params=pltpu.CompilerParams(
            dimension_semantics=("parallel", "arbitrary"),
        ),
        cost_estimate=pl.CostEstimate(
            flops=5 * B * N,
            transcendentals=0,
            bytes_accessed=bytes_accessed,
        ),
    )(Y_l, pred_l, nan_array)

    # Tiny finalize over nb per-row-tile partials (kernel emitted
    # sum_rows(row_mean) per tile); folds the batch mean into one 1/B scale.
    # TODO(synk): at shipped 8x32 shapes this whole loss is best fused into the
    # kernel producing pred_l rather than a standalone launch.
    return (jnp.sum(partial) / jnp.float32(B)).astype(jnp.float32)


def _reference(Y_l, pred_l, nan_array):
    sq = (Y_l - pred_l) ** 2
    lens = jnp.sum(~jnp.isnan(nan_array), axis=1).astype(jnp.float32)
    means = jnp.sum(sq, axis=1) / lens
    return jnp.mean(means).astype(jnp.float32)


def _make_inputs(key, B, N):
    k1, k2, k3, k4 = jax.random.split(key, 4)
    Y_l = jax.random.normal(k1, (B, N), dtype=jnp.float32)
    pred_l = jax.random.normal(k2, (B, N), dtype=jnp.float32)
    nan_vals = jax.random.normal(k3, (B, N), dtype=jnp.float32)
    nan_mask = jax.random.uniform(k4, (B, N)) < 0.3
    nan_array = jnp.where(nan_mask, jnp.float32(jnp.nan), nan_vals)
    return Y_l, pred_l, nan_array


if __name__ == "__main__":
    key = jax.random.PRNGKey(0)
    k_small, k_grid = jax.random.split(key)

    # 1) shipped-size case: single (8, 32) block, grid = (1, 1)
    Y_l, pred_l, nan_array = _make_inputs(k_small, 8, 32)
    loss = jax.block_until_ready(custom_loss_parameters(Y_l, pred_l, nan_array))
    ref = _reference(Y_l, pred_l, nan_array)
    assert jnp.allclose(loss, ref, rtol=1e-5, atol=1e-6), (loss, ref)

    # 2) gridded case exercising the k-accumulation path: grid = (2, 2)
    Y2, P2, NA2 = _make_inputs(k_grid, 512, 2048)
    loss2 = jax.block_until_ready(custom_loss_parameters(Y2, P2, NA2))
    ref2 = _reference(Y2, P2, NA2)
    assert jnp.allclose(loss2, ref2, rtol=1e-5, atol=1e-6), (loss2, ref2)

    print("KERNEL_OK")
</pallas_src>

<mosaic_0001>
module attributes {stable_mosaic.version = 11 : i64} {
  func.func @_loss_kernel(%arg0: i32, %arg1: i32, %arg2: memref<8x32xf32, #tpu.memory_space<vmem>>, %arg3: memref<8x32xf32, #tpu.memory_space<vmem>>, %arg4: memref<8x32xf32, #tpu.memory_space<vmem>>, %arg5: memref<1x1xf32, #tpu.memory_space<vmem>>, %arg6: memref<8x1xf32, #tpu.memory_space<vmem>>, %arg7: memref<8x1xf32, #tpu.memory_space<vmem>>) attributes {dimension_semantics = [#tpu.dimension_semantics<parallel>, #tpu.dimension_semantics<arbitrary>], iteration_bounds = array<i64: 1, 1>, scalar_prefetch = 0 : i64, scratch_operands = 2 : i64, tpu.core_type = #tpu.core_type<tc>, window_params = [{transform_indices = @transform_0, window_bounds = array<i64: 8, 32>}, {transform_indices = @transform_1, window_bounds = array<i64: 8, 32>}, {transform_indices = @transform_2, window_bounds = array<i64: 8, 32>}, {transform_indices = @transform_3, window_bounds = array<i64: 1, 1>}]} {
    %c0_i32 = arith.constant 0 : i32
    %0 = arith.cmpi eq, %arg1, %c0_i32 : i32
    %1 = arith.extui %0 : i1 to i32
    %c0_i32_0 = arith.constant 0 : i32
    %2 = arith.cmpi ne, %1, %c0_i32_0 : i32
    scf.if %2 {
      %cst_17 = arith.constant 0.000000e+00 : f32
      %24 = vector.broadcast %cst_17 : f32 to vector<8x1xf32>
      %c0_18 = arith.constant 0 : index
      %c0_19 = arith.constant 0 : index
      %25 = vector.load %arg6[%c0_18, %c0_19] : memref<8x1xf32, #tpu.memory_space<vmem>>, vector<8x1xf32>
      tpu.vector_store %arg6[%c0_18, %c0_19], %24 {strides = array<i32>} : memref<8x1xf32, #tpu.memory_space<vmem>>, vector<8x1xf32>,
      %cst_20 = arith.constant 0.000000e+00 : f32
      %26 = vector.broadcast %cst_20 : f32 to vector<8x1xf32>
      %c0_21 = arith.constant 0 : index
      %c0_22 = arith.constant 0 : index
      %27 = vector.load %arg7[%c0_21, %c0_22] : memref<8x1xf32, #tpu.memory_space<vmem>>, vector<8x1xf32>
      tpu.vector_store %arg7[%c0_21, %c0_22], %26 {strides = array<i32>} : memref<8x1xf32, #tpu.memory_space<vmem>>, vector<8x1xf32>,
    } else {
    }
    %c0 = arith.constant 0 : index
    %c0_1 = arith.constant 0 : index
    %3 = vector.load %arg2[%c0, %c0_1] : memref<8x32xf32, #tpu.memory_space<vmem>>, vector<8x32xf32>
    %c0_2 = arith.constant 0 : index
    %c0_3 = arith.constant 0 : index
    %4 = vector.load %arg3[%c0_2, %c0_3] : memref<8x32xf32, #tpu.memory_space<vmem>>, vector<8x32xf32>
    %5 = arith.subf %3, %4 : vector<8x32xf32>
    %c0_4 = arith.constant 0 : index
    %c0_5 = arith.constant 0 : index
    %6 = vector.load %arg6[%c0_4, %c0_5] : memref<8x1xf32, #tpu.memory_space<vmem>>, vector<8x1xf32>
    %7 = arith.mulf %5, %5 : vector<8x32xf32>
    %cst = arith.constant dense<0.000000e+00> : vector<8xf32>
    %8 = vector.multi_reduction <add>, %7, %cst [1] : vector<8x32xf32> to vector<8xf32>
    %9 = vector.shape_cast %8 : vector<8xf32> to vector<8x1xf32>
    %10 = arith.addf %6, %9 : vector<8x1xf32>
    %c0_6 = arith.constant 0 : index
    %c0_7 = arith.constant 0 : index
    %11 = vector.load %arg6[%c0_6, %c0_7] : memref<8x1xf32, #tpu.memory_space<vmem>>, vector<8x1xf32>
    tpu.vector_store %arg6[%c0_6, %c0_7], %10 {strides = array<i32>} : memref<8x1xf32, #tpu.memory_space<vmem>>, vector<8x1xf32>,
    %c0_8 = arith.constant 0 : index
    %c0_9 = arith.constant 0 : index
    %12 = vector.load %arg4[%c0_8, %c0_9] : memref<8x32xf32, #tpu.memory_space<vmem>>, vector<8x32xf32>
    %c0_10 = arith.constant 0 : index
    %c0_11 = arith.constant 0 : index
    %13 = vector.load %arg7[%c0_10, %c0_11] : memref<8x1xf32, #tpu.memory_space<vmem>>, vector<8x1xf32>
    %14 = arith.cmpf oeq, %12, %12 : vector<8x32xf32>
    %15 = arith.extui %14 : vector<8x32xi1> to vector<8x32xi32>
    %16 = arith.sitofp %15 : vector<8x32xi32> to vector<8x32xf32>
    %cst_12 = arith.constant dense<0.000000e+00> : vector<8xf32>
    %17 = vector.multi_reduction <add>, %16, %cst_12 [1] : vector<8x32xf32> to vector<8xf32>
    %18 = vector.shape_cast %17 : vector<8xf32> to vector<8x1xf32>
    %19 = arith.addf %13, %18 : vector<8x1xf32>
    %c0_13 = arith.constant 0 : index
    %c0_14 = arith.constant 0 : index
    %20 = vector.load %arg7[%c0_13, %c0_14] : memref<8x1xf32, #tpu.memory_space<vmem>>, vector<8x1xf32>
    tpu.vector_store %arg7[%c0_13, %c0_14], %19 {strides = array<i32>} : memref<8x1xf32, #tpu.memory_space<vmem>>, vector<8x1xf32>,
    %c0_i32_15 = arith.constant 0 : i32
    %21 = arith.cmpi eq, %arg1, %c0_i32_15 : i32
    %22 = arith.extui %21 : i1 to i32
    %c0_i32_16 = arith.constant 0 : i32
    %23 = arith.cmpi ne, %22, %c0_i32_16 : i32
    scf.if %23 {
      %c0_17 = arith.constant 0 : index
      %c0_18 = arith.constant 0 : index
      %24 = vector.load %arg6[%c0_17, %c0_18] : memref<8x1xf32, #tpu.memory_space<vmem>>, vector<8x1xf32>
      %c0_19 = arith.constant 0 : index
      %c0_20 = arith.constant 0 : index
      %25 = vector.load %arg7[%c0_19, %c0_20] : memref<8x1xf32, #tpu.memory_space<vmem>>, vector<8x1xf32>
      %26 = tpu.reciprocal %25 : vector<8x1xf32> -> vector<8x1xf32>
      %27 = arith.mulf %24, %26 : vector<8x1xf32>
      %cst_21 = arith.constant dense<0.000000e+00> : vector<1xf32>
      %28 = vector.multi_reduction <add>, %27, %cst_21 [0] : vector<8x1xf32> to vector<1xf32>
      %29 = vector.shape_cast %28 : vector<1xf32> to vector<1x1xf32>
      %c0_22 = arith.constant 0 : index
      %c0_23 = arith.constant 0 : index
      %30 = vector.load %arg5[%c0_22, %c0_23] : memref<1x1xf32, #tpu.memory_space<vmem>>, vector<1x1xf32>
      tpu.vector_store %arg5[%c0_22, %c0_23], %29 {strides = array<i32>} : memref<1x1xf32, #tpu.memory_space<vmem>>, vector<1x1xf32>,
    } else {
    }
    return
  }
  func.func @transform_0(%arg0: i32, %arg1: i32) -> (i32, i32) {
    %c0_i32 = arith.constant 0 : i32
    return %arg0, %arg1 : i32, i32
  }
  func.func @transform_1(%arg0: i32, %arg1: i32) -> (i32, i32) {
    %c0_i32 = arith.constant 0 : i32
    return %arg0, %arg1 : i32, i32
  }
  func.func @transform_2(%arg0: i32, %arg1: i32) -> (i32, i32) {
    %c0_i32 = arith.constant 0 : i32
    return %arg0, %arg1 : i32, i32
  }
  func.func @transform_3(%arg0: i32, %arg1: i32) -> (i32, i32) {
    %c0_i32 = arith.constant 0 : i32
    %c0_i32_0 = arith.constant 0 : i32
    return %arg0, %c0_i32 : i32, i32
  }
}

</mosaic_0001>

<llo_original>
// kernel: tpu_custom_call.1
$region0: #{tpu_custom_call.1}
  #allocation0 [shape = 'u32[]', space=smem, size = 0x4, offset = 0x4, fixed_abs, tag = 'smem constant byte address 0x4 - core index']
  #allocation1 [shape = 'u32[144,128]{1,0:T(1,128)}', space=vmem, size = 0x12000, scoped, tag = 'internal scratch']
  #allocation2 [shape = 'f32[8,1]{1,0:T(8,128)}', space=vmem, size = 0x1000, scoped, tag = 'scratch operand']
  #allocation3 [shape = 'f32[8,1]{1,0:T(8,128)}', space=vmem, size = 0x1000, scoped, tag = 'scratch operand']
  %s0 = inlined_call_operand.hbm [shape: f32[8,32], index: 0, kind: input, shape index: {}]
  %s1 = inlined_call_operand.hbm [shape: f32[8,32], index: 1, kind: input, shape index: {}]
  %s2 = inlined_call_operand.hbm [shape: f32[8,32], index: 2, kind: input, shape index: {}]
  %s3 = inlined_call_operand.hbm [shape: f32[1,1], index: 3, kind: output, shape index: {}]
  %s4 = sld [smem:[#allocation0]]
  $region42: #{tpu_custom_call.1} parent=0
    _
  %s6 = ssub.s32 1, %s4
  %s7 = scalar_select 0, %s6, %s4
  $region1: #{tpu_custom_call.1} parent=0
    #allocation4 [shape = 'u8[4096]{0}', space=vmem, size = 0x1000, scoped, tag = 'input window, operand 0, single buffered']
    #allocation5 [shape = 's32[1]{0}', space=sflag, size = 0x4, scoped, tag = 'scoped memory for tpu_custom_call.1']
    #allocation6 [shape = 's32[1]{0}', space=sflag, size = 0x4, scoped, tag = 'scoped memory for tpu_custom_call.1']
    #allocation7 [shape = 'u8[4096]{0}', space=vmem, size = 0x1000, scoped, tag = 'input window, operand 1, single buffered']
    #allocation8 [shape = 's32[1]{0}', space=sflag, size = 0x4, scoped, tag = 'scoped memory for tpu_custom_call.1']
    #allocation9 [shape = 'u8[4096]{0}', space=vmem, size = 0x1000, scoped, tag = 'input window, operand 2, single buffered']
    #allocation10 [shape = 'u8[512]{0}', space=vmem, size = 0x400, scoped, tag = 'output window, operand 0, single buffered']
    %8 = vsyncpa [#allocation5], 0
    %9 = vsyncpa [#allocation8], 0
    %10 = vsyncpa [#allocation6], 0
    // Predicated region
    $region2: #{tpu_custom_call.1} parent=1 // pred_check
      _
    $region3: #{tpu_custom_call.1} parent=1 // pred_check_branch
      %12 = sbr.rel (0) target = $region5
    $region4: #{tpu_custom_call.1} parent=1 // pred_region
      %s14 = ssub.s32 128, 128
      %15 = vsyncadd [#allocation5], %s14
      %s17 = sshll.u32 [#allocation4], 4
      %s18 = int_to_ptr.vmem [resolvable:$true] %s17
      %20 = dma.hbm_to_vmem [thread:$0]  %s0, 128, %s18, [#allocation5]
    $region5: #{tpu_custom_call.1} parent=1 // pred_fallthru
      _
    // Predicated region
    $region6: #{tpu_custom_call.1} parent=1 // pred_check
      _
    $region7: #{tpu_custom_call.1} parent=1 // pred_check_branch
      %22 = sbr.rel (0) target = $region9
    $region8: #{tpu_custom_call.1} parent=1 // pred_region
      %s24 = ssub.s32 128, 128
      %25 = vsyncadd [#allocation8], %s24
      %s27 = sshll.u32 [#allocation7], 4
      %s28 = int_to_ptr.vmem [resolvable:$true] %s27
      %30 = dma.hbm_to_vmem [thread:$0]  %s1, 128, %s28, [#allocation8]
    $region9: #{tpu_custom_call.1} parent=1 // pred_fallthru
      _
    // Predicated region
    $region10: #{tpu_custom_call.1} parent=1 // pred_check
      _
    $region11: #{tpu_custom_call.1} parent=1 // pred_check_branch
      %32 = sbr.rel (0) target = $region13
    $region12: #{tpu_custom_call.1} parent=1 // pred_region
      %s34 = ssub.s32 128, 128
      %35 = vsyncadd [#allocation8], %s34
      %s37 = sshll.u32 [#allocation9], 4
      %s38 = int_to_ptr.vmem [resolvable:$true] %s37
      %40 = dma.hbm_to_vmem [thread:$0]  %s2, 128, %s38, [#allocation8]
    $region13: #{tpu_custom_call.1} parent=1 // pred_fallthru
      _
    // Predicated region
    $region14: #{tpu_custom_call.1} parent=1 // pred_check
      _
    $region15: #{tpu_custom_call.1} parent=1 // pred_check_branch
      %42 = sbr.rel (0) target = $region17
    $region16: #{tpu_custom_call.1} parent=1 // pred_region
      %43 = dma.done [#allocation5], 128
    $region17: #{tpu_custom_call.1} parent=1 // pred_fallthru
      _
    // Predicated region
    $region18: #{tpu_custom_call.1} parent=1 // pred_check
      _
    $region19: #{tpu_custom_call.1} parent=1 // pred_check_branch
      %45 = sbr.rel (0) target = $region21
    $region20: #{tpu_custom_call.1} parent=1 // pred_region
      %46 = dma.done [#allocation8], 128
    $region21: #{tpu_custom_call.1} parent=1 // pred_fallthru
      _
    // Predicated region
    $region22: #{tpu_custom_call.1} parent=1 // pred_check
      _
    $region23: #{tpu_custom_call.1} parent=1 // pred_check_branch
      %48 = sbr.rel (0) target = $region25
    $region24: #{tpu_custom_call.1} parent=1 // pred_region
      %49 = dma.done [#allocation8], 128
    $region25: #{tpu_custom_call.1} parent=1 // pred_fallthru
      _
    %p50 = scmp.eq.s32.totalorder 0, 0
    // Predicated region
    $region26: #{tpu_custom_call.1} parent=1 // pred_check
      %p51 = pneg %p50
    $region27: #{tpu_custom_call.1} parent=1 // pred_check_branch
      %53 = sbr.rel (%p51) target = $region29
    $region28: #{tpu_custom_call.1} parent=1 // pred_region
      %vm54 = vcmask 7168
      %55 = vst.msk [vmem:[#allocation2] sm:$0xff] %vm54, 0.0
      %56 = vst.msk [vmem:[#allocation3] sm:$0xff] %vm54, 0.0
    $region29: #{tpu_custom_call.1} parent=1 // pred_fallthru
      _
    %v57 = vld [vmem:[#allocation4] sm:$0xff]
    %v58 = vld [vmem:[#allocation7] sm:$0xff]
    %v59 = vsub.f32 %v57, %v58
    %v60 = vld [vmem:[#allocation2] sm:$0xff]
    %v61 = vmul.f32 %v59, %v59
    %vm62 = vcmask 261120
    %v63 = vsel %vm62, %v61, 0.0
    %64 = vadd.xlane.f32.xlu0 %v63
    %v65 = vpop.xlane.xlu0 %64
    %v66 = vadd.f32 %v60, %v65
    %vm67 = vcmask 7168
    %68 = vst.msk [vmem:[#allocation2] sm:$0xff] %vm67, %v66
    %v69 = vld [vmem:[#allocation9] sm:$0xff]
    %v70 = vld [vmem:[#allocation3] sm:$0xff]
    %vm71 = vcmp.eq.f32.partialorder %v69, %v69
    %v72 = vsel %vm71, 1, 0
    %v73 = vcvt.s32.f32 %v72
    %v74 = vsel %vm62, %v73, 0.0
    %75 = vadd.xlane.f32.xlu0 %v74
    %v76 = vpop.xlane.xlu0 %75
    %v77 = vadd.f32 %v70, %v76
    %78 = vst.msk [vmem:[#allocation3] sm:$0xff] %vm67, %v77
    // Predicated region
    $region30: #{tpu_custom_call.1} parent=1 // pred_check
      %p79 = pneg %p50
    $region31: #{tpu_custom_call.1} parent=1 // pred_check_branch
      %81 = sbr.rel (%p79) target = $region33
    $region32: #{tpu_custom_call.1} parent=1 // pred_region
      %v82 = vld [vmem:[#allocation2] sm:$0xff]
      %v83 = vld [vmem:[#allocation3] sm:$0xff]
      %v84 = vrcp.pop %v83
      %v85 = vmul.f32 %v82, %v84
      %v86 = vsel %vm67, %v85, 0.0
      %v87 = vrot.slane %v86, 4
      %v88 = vadd.f32 %v86, %v87
      %v89 = vrot.slane %v88, 2
      %v90 = vadd.f32 %v88, %v89
      %v91 = vrot.slane %v90, 1
      %v92 = vadd.f32 %v90, %v91
      %vm93 = vcmask 0
      %94 = vst.msk [vmem:[#allocation10] sm:$0x1] %vm93, %v92
    $region33: #{tpu_custom_call.1} parent=1 // pred_fallthru
      _
    // Predicated region
    $region34: #{tpu_custom_call.1} parent=1 // pred_check
      _
    $region35: #{tpu_custom_call.1} parent=1 // pred_check_branch
      %96 = sbr.rel (0) target = $region37
    $region36: #{tpu_custom_call.1} parent=1 // pred_region
      %s98 = ssub.s32 16, 16
      %99 = vsyncadd [#allocation6], %s98
      %s101 = sshll.u32 [#allocation10], 4
      %s102 = int_to_ptr.vmem [resolvable:$true] %s101
      %104 = dma.vmem_to_hbm [thread:$0]  %s102, 16, %s3, [#allocation6]
    $region37: #{tpu_custom_call.1} parent=1 // pred_fallthru
      _
    // Predicated region
    $region38: #{tpu_custom_call.1} parent=1 // pred_check
      _
    $region39: #{tpu_custom_call.1} parent=1 // pred_check_branch
      %106 = sbr.rel (0) target = $region41
    $region40: #{tpu_custom_call.1} parent=1 // pred_region
      %107 = dma.done [#allocation6], 16
    $region41: #{tpu_custom_call.1} parent=1 // pred_fallthru
      _
    %108 = vsyncpa [#allocation5], 1
    %109 = vsyncpa [#allocation8], 1
    %110 = vsyncpa [#allocation6], 1

</llo_original>
